<compile_context>
chip_gen: v7x
topology: tpu7x:2x2x1
jax: 0.10.0
libtpu: 0.0.40
codegen_flags: <defaults>
</compile_context>

<pallas_src>
import functools
import math

import jax
import jax.numpy as jnp
from jax.experimental import pallas as pl
from jax.experimental.pallas import tpu as pltpu


# --------------------------------------------------------------------------- #
# Tiling helpers
# --------------------------------------------------------------------------- #
def _sublane_multiple(dtype) -> int:
    """Row-tile multiple that keeps sublane packing unmasked."""
    itemsize = jnp.dtype(dtype).itemsize
    if itemsize >= 4:
        return 8        # f32
    if itemsize == 2:
        return 16       # bf16 / f16
    return 32           # int8 / fp8


def _vmem_capacity_bytes() -> int:
    try:
        return int(pltpu.get_tpu_info().vmem_capacity_bytes)
    except Exception:
        # Conservative fallback = v7x per-TensorCore VMEM.
        return 64 << 20


def _pick_tile_rows(rows: int, dim: int, dtype, n_stream_inputs: int) -> int:
    """Largest row tile whose pipeline buffers + f32 temps fit a VMEM budget."""
    mult = _sublane_multiple(dtype)
    in_itemsize = jnp.dtype(dtype).itemsize
    vmem_cap = _vmem_capacity_bytes()
    # Target well under capacity: double-buffered streaming tiles + temporaries
    # should use <= half of VMEM and never more than ~48 MiB.
    budget = min(vmem_cap // 2, 48 << 20)
    # Per tile row:
    #   - each streamed input and the output is double-buffered by the pipeline
    #   - ~3 f32-wide live temporaries (x.astype(f32), x*x, x*inv) in the body
    per_row = 2 * (n_stream_inputs + 1) * in_itemsize * dim + 3 * 4 * dim
    tile_rows = max(mult, (budget // per_row) // mult * mult)
    # Cap the block so the grid keeps many steps (pipelining + v7x dual-core).
    tile_rows = min(tile_rows, 2048)
    # Never bigger than the sublane-rounded row count.
    rows_rounded = ((rows + mult - 1) // mult) * mult
    return max(mult, min(tile_rows, rows_rounded))


# --------------------------------------------------------------------------- #
# Kernel
# --------------------------------------------------------------------------- #
def _rmsnorm_kernel(*refs, has_add: bool, has_scale: bool, eps: float,
                    inv_dim: float):
    # Ref order: x_ref, [y_ref], [scale_ref], o_ref
    idx = 0
    x = refs[idx][...].astype(jnp.float32)
    idx += 1
    if has_add:
        x = x + refs[idx][...].astype(jnp.float32)   # fused residual add
        idx += 1
    scale = None
    if has_scale:
        scale = refs[idx][...]                       # (1, dim), already f32
        idx += 1
    o_ref = refs[idx]

    # sum on XLU, *inv_dim as a constant multiply, rsqrt on EUP.
    ms = jnp.sum(x * x, axis=-1, keepdims=True) * inv_dim    # (tile_rows, 1)
    inv = jax.lax.rsqrt(ms + eps)
    out = x * inv
    if has_scale:
        out = out * scale                                    # broadcast rows
    o_ref[...] = out.astype(o_ref.dtype)


# --------------------------------------------------------------------------- #
# Wrappers
# --------------------------------------------------------------------------- #
def _rms_norm_impl(x, y, scale, eps, tile_rows):
    orig_shape = x.shape
    dim = orig_shape[-1]
    rows = int(math.prod(orig_shape[:-1])) if len(orig_shape) > 1 else 1

    streamed = [x.reshape(rows, dim)]
    if y is not None:
        streamed.append(y.reshape(rows, dim))

    if tile_rows is None:
        tile_rows = _pick_tile_rows(rows, dim, x.dtype, len(streamed))
    mult = _sublane_multiple(x.dtype)
    tile_rows = max(mult, (int(tile_rows) // mult) * mult)

    # Pad rows up to a multiple of the tile so every block is full-size and
    # unmasked; padded rows are sliced off afterwards (mean(0)+eps is finite).
    num_blocks = pl.cdiv(rows, tile_rows)
    padded_rows = num_blocks * tile_rows
    if padded_rows != rows:
        pad = padded_rows - rows
        streamed = [jnp.pad(a, ((0, pad), (0, 0))) for a in streamed]

    row_spec = pl.BlockSpec((tile_rows, dim), lambda i: (i, 0))
    in_specs = [row_spec for _ in streamed]
    operands = list(streamed)
    if scale is not None:
        # Pre-cast to compute dtype; constant index_map keeps it VMEM-resident.
        operands.append(scale.astype(jnp.float32).reshape(1, dim))
        in_specs.append(pl.BlockSpec((1, dim), lambda i: (0, 0)))

    kernel = functools.partial(
        _rmsnorm_kernel,
        has_add=(y is not None),
        has_scale=(scale is not None),
        eps=float(eps),
        inv_dim=1.0 / float(dim),
    )

    # Raise the scoped VMEM limit so large row tiles double-buffer cleanly on
    # v5e/v6e (defaults 16/32 MiB); stay under v7x's 64 MiB physical VMEM.
    vmem_cap = _vmem_capacity_bytes()
    vmem_limit = int(min(vmem_cap * 3 // 4, 96 << 20))

    out2d = pl.pallas_call(
        kernel,
        out_shape=jax.ShapeDtypeStruct((padded_rows, dim), x.dtype),
        grid_spec=pltpu.PrefetchScalarGridSpec(
            num_scalar_prefetch=0,
            grid=(num_blocks,),
            in_specs=in_specs,
            out_specs=row_spec,
        ),
        compiler_params=pltpu.CompilerParams(
            dimension_semantics=("parallel",),
            vmem_limit_bytes=vmem_limit,
        ),
    )(*operands)

    if padded_rows != rows:
        out2d = out2d[:rows]
    return out2d.reshape(orig_shape)


def rms_norm(x, scale=None, eps=1e-8, *, tile_rows=None):
    """Pallas RMSNorm over the last axis of x. scale: optional (dim,) array."""
    return _rms_norm_impl(x, None, scale, eps, tile_rows)


def rms_norm_add(x, y, scale=None, eps=1e-8, *, tile_rows=None):
    """Fused (x + y) RMSNorm — residual add done inside the kernel."""
    return _rms_norm_impl(x, y, scale, eps, tile_rows)


class RMSNorm:
    """JAX/Pallas port of toto.model.util.RMSNorm (forward pass only)."""

    def __init__(self, dim: int, include_weight: bool = True, eps: float = 1e-8):
        self.eps = eps
        self.dim = dim
        # Deterministic init: torch.ones(dim), same as the PyTorch module.
        self.scale = jnp.ones((dim,), dtype=jnp.float32) if include_weight else None

    def __call__(self, x):
        return rms_norm(x, self.scale, self.eps)

    def increment_and_forward_(self, x, y):
        # Fused add + RMSNorm (same semantics as forward(x + y)).
        return rms_norm_add(x, y, self.scale, self.eps)


# --------------------------------------------------------------------------- #
# Reference + self-test
# --------------------------------------------------------------------------- #
def _reference_rmsnorm(x, scale, eps):
    x32 = x.astype(jnp.float32)
    x_normed = x32 / jnp.sqrt(jnp.mean(x32 * x32, axis=-1, keepdims=True) + eps)
    if scale is not None:
        x_normed = x_normed * scale
    return x_normed.astype(x.dtype)


if __name__ == "__main__":
    key = jax.random.PRNGKey(0)
    batch, seq, hidden = 2, 8, 32
    x = jax.random.normal(key, (batch, seq, hidden), dtype=jnp.float32)

    norm = RMSNorm(dim=hidden, include_weight=True, eps=1e-8)
    # Non-trivial deterministic scale so the multiply is tested.
    norm.scale = 1.0 + 0.01 * jnp.arange(hidden, dtype=jnp.float32)

    out = norm(x)
    jax.block_until_ready(out)
    ref = _reference_rmsnorm(x, norm.scale, norm.eps)
    assert out.shape == x.shape and out.dtype == x.dtype
    assert jnp.allclose(out, ref, atol=1e-5, rtol=1e-5)

    # Fused residual-add path.
    y = jax.random.normal(jax.random.PRNGKey(1), (batch, seq, hidden),
                          dtype=jnp.float32)
    out2 = norm.increment_and_forward_(x, y)
    jax.block_until_ready(out2)
    assert jnp.allclose(out2, _reference_rmsnorm(x + y, norm.scale, norm.eps),
                        atol=1e-5, rtol=1e-5)

    # No-weight variant.
    norm_nw = RMSNorm(dim=hidden, include_weight=False, eps=1e-8)
    out3 = norm_nw(x)
    jax.block_until_ready(out3)
    assert jnp.allclose(out3, _reference_rmsnorm(x, None, 1e-8),
                        atol=1e-5, rtol=1e-5)

    # Row count not a multiple of the sublane tile -> exercises the pad path.
    x_odd = jax.random.normal(jax.random.PRNGKey(2), (3, 5, hidden),
                              dtype=jnp.float32)
    out4 = norm(x_odd)
    jax.block_until_ready(out4)
    assert jnp.allclose(out4, _reference_rmsnorm(x_odd, norm.scale, norm.eps),
                        atol=1e-5, rtol=1e-5)

    # bf16 input: f32 accumulation inside the kernel, bf16 output.
    x_bf = x.astype(jnp.bfloat16)
    out5 = norm(x_bf)
    jax.block_until_ready(out5)
    assert out5.dtype == jnp.bfloat16
    assert jnp.allclose(out5.astype(jnp.float32),
                        _reference_rmsnorm(x_bf, norm.scale, norm.eps)
                        .astype(jnp.float32),
                        atol=2e-2, rtol=2e-2)

    print("KERNEL_OK")
</pallas_src>

<mosaic_0001>
module attributes {stable_mosaic.version = 11 : i64} {
  func.func @_rmsnorm_kernel(%arg0: i32, %arg1: memref<16x32xf32, #tpu.memory_space<vmem>>, %arg2: memref<1x32xf32, #tpu.memory_space<vmem>>, %arg3: memref<16x32xf32, #tpu.memory_space<vmem>>) attributes {dimension_semantics = [#tpu.dimension_semantics<parallel>], iteration_bounds = array<i64: 1>, scalar_prefetch = 0 : i64, scratch_operands = 0 : i64, tpu.core_type = #tpu.core_type<tc>, window_params = [{transform_indices = @transform_0, window_bounds = array<i64: 16, 32>}, {pipeline_mode = #tpu.pipeline_mode<synchronous>, transform_indices = @transform_1, window_bounds = array<i64: 1, 32>}, {transform_indices = @transform_2, window_bounds = array<i64: 16, 32>}]} {
    %c0 = arith.constant 0 : index
    %c0_0 = arith.constant 0 : index
    %0 = vector.load %arg1[%c0, %c0_0] : memref<16x32xf32, #tpu.memory_space<vmem>>, vector<16x32xf32>
    %c0_1 = arith.constant 0 : index
    %c0_2 = arith.constant 0 : index
    %1 = vector.load %arg2[%c0_1, %c0_2] : memref<1x32xf32, #tpu.memory_space<vmem>>, vector<1x32xf32>
    %2 = arith.mulf %0, %0 : vector<16x32xf32>
    %cst = arith.constant dense<0.000000e+00> : vector<16xf32>
    %3 = vector.multi_reduction <add>, %2, %cst [1] : vector<16x32xf32> to vector<16xf32>
    %4 = vector.shape_cast %3 : vector<16xf32> to vector<16x1xf32>
    %cst_3 = arith.constant 3.125000e-02 : f32
    %5 = vector.broadcast %cst_3 : f32 to vector<16x1xf32>
    %6 = arith.mulf %4, %5 : vector<16x1xf32>
    %cst_4 = arith.constant 9.99999993E-9 : f32
    %7 = vector.broadcast %cst_4 : f32 to vector<16x1xf32>
    %8 = arith.addf %6, %7 : vector<16x1xf32>
    %9 = math.rsqrt %8 : vector<16x1xf32>
    %10 = vector.broadcast %9 : vector<16x1xf32> to vector<16x32xf32>
    %11 = arith.mulf %0, %10 : vector<16x32xf32>
    %12 = vector.broadcast %1 : vector<1x32xf32> to vector<16x32xf32>
    %13 = arith.mulf %11, %12 : vector<16x32xf32>
    %c0_5 = arith.constant 0 : index
    %c0_6 = arith.constant 0 : index
    %14 = vector.load %arg3[%c0_5, %c0_6] : memref<16x32xf32, #tpu.memory_space<vmem>>, vector<16x32xf32>
    tpu.vector_store %arg3[%c0_5, %c0_6], %13 {strides = array<i32>} : memref<16x32xf32, #tpu.memory_space<vmem>>, vector<16x32xf32>,
    return
  }
  func.func @transform_0(%arg0: i32) -> (i32, i32) {
    %c0_i32 = arith.constant 0 : i32
    %c0_i32_0 = arith.constant 0 : i32
    return %arg0, %c0_i32 : i32, i32
  }
  func.func @transform_1(%arg0: i32) -> (i32, i32) {
    %c0_i32 = arith.constant 0 : i32
    %c0_i32_0 = arith.constant 0 : i32
    %c0_i32_1 = arith.constant 0 : i32
    return %c0_i32, %c0_i32_0 : i32, i32
  }
  func.func @transform_2(%arg0: i32) -> (i32, i32) {
    %c0_i32 = arith.constant 0 : i32
    %c0_i32_0 = arith.constant 0 : i32
    return %arg0, %c0_i32 : i32, i32
  }
}

</mosaic_0001>

<llo_original>
// kernel: tpu_custom_call.1
$region0: #{tpu_custom_call.1}
  #allocation0 [shape = 'u32[]', space=smem, size = 0x4, offset = 0x4, fixed_abs, tag = 'smem constant byte address 0x4 - core index']
  #allocation1 [shape = 'u32[144,128]{1,0:T(1,128)}', space=vmem, size = 0x12000, scoped, tag = 'internal scratch']
  %s0 = inlined_call_operand.hbm [shape: f32[16,32], index: 0, kind: input, shape index: {}]
  %s1 = inlined_call_operand.vmem [shape: f32[1,32], index: 1, kind: input, shape index: {}]
  %s2 = inlined_call_operand.hbm [shape: f32[16,32], index: 2, kind: output, shape index: {}]
  %s3 = sld [smem:[#allocation0]]
  $region22: #{tpu_custom_call.1} parent=0
    _
  %s5 = ssub.s32 1, %s3
  %s6 = scalar_select 0, %s5, %s3
  $region1: #{tpu_custom_call.1} parent=0
    #allocation2 [shape = 'u8[8192]{0}', space=vmem, size = 0x2000, scoped, tag = 'input window, operand 0, single buffered']
    #allocation3 [shape = 's32[1]{0}', space=sflag, size = 0x4, scoped, tag = 'scoped memory for tpu_custom_call.1']
    #allocation4 [shape = 's32[1]{0}', space=sflag, size = 0x4, scoped, tag = 'scoped memory for tpu_custom_call.1']
    #allocation5 [shape = 'u8[8192]{0}', space=vmem, size = 0x2000, scoped, tag = 'output window, operand 0, single buffered']
    %7 = vsyncpa [#allocation3], 0
    %8 = vsyncpa [#allocation4], 0
    // Predicated region
    $region2: #{tpu_custom_call.1} parent=1 // pred_check
      _
    $region3: #{tpu_custom_call.1} parent=1 // pred_check_branch
      %10 = sbr.rel (0) target = $region5
    $region4: #{tpu_custom_call.1} parent=1 // pred_region
      %s12 = ssub.s32 256, 256
      %13 = vsyncadd [#allocation3], %s12
      %s14 = sshll.u32 [#allocation2], 4
      %s15 = int_to_ptr.vmem [resolvable:$true] %s14
      %20 = dma.hbm_to_vmem [thread:$0]  %s0, 256, %s15, [#allocation3], 128, 128, 8
    $region5: #{tpu_custom_call.1} parent=1 // pred_fallthru
      _
    // Predicated region
    $region6: #{tpu_custom_call.1} parent=1 // pred_check
      _
    $region7: #{tpu_custom_call.1} parent=1 // pred_check_branch
      %22 = sbr.rel (0) target = $region9
    $region8: #{tpu_custom_call.1} parent=1 // pred_region
      _
    $region9: #{tpu_custom_call.1} parent=1 // pred_fallthru
      _
    // Predicated region
    $region10: #{tpu_custom_call.1} parent=1 // pred_check
      _
    $region11: #{tpu_custom_call.1} parent=1 // pred_check_branch
      %24 = sbr.rel (0) target = $region13
    $region12: #{tpu_custom_call.1} parent=1 // pred_region
      %25 = dma.done [#allocation3], 256
    $region13: #{tpu_custom_call.1} parent=1 // pred_fallthru
      _
    %v26 = vld [vmem:[#allocation2] sm:$0xff]
    %v27 = vld [vmem:[#allocation2 + $0x8] sm:$0xff]
    %v28 = vld [vmem:[%s1] sm:$0x1]
    %v29 = vmul.f32 %v26, %v26
    %v30 = vmul.f32 %v27, %v27
    %vm31 = vcmask 261120
    %v32 = vsel %vm31, %v29, 0.0
    %33 = vadd.xlane.f32.xlu0 %v32
    %v34 = vpop.xlane.xlu0 %33
    %v35 = vsel %vm31, %v30, 0.0
    %36 = vadd.xlane.f32.xlu0 %v35
    %v37 = vpop.xlane.xlu0 %36
    %v38 = vmul.f32 %v34, 0.03125
    %v39 = vmul.f32 %v37, 0.03125
    %v40 = vadd.f32 %v38, 1e-08
    %v41 = vadd.f32 %v39, 1e-08
    %v42 = vrsqrt.pop %v40
    %v43 = vrsqrt.pop %v41
    %v44 = vmul.f32 %v26, %v42
    %v45 = vmul.f32 %v27, %v43
    %v47 = vlaneseq
    %v48 = vshrl.u32 %v47, 7
    %v49 = vsub.s32 0, %v48
    %v50 = vrot.slane %v28, %v49
    %v52 = vmul.f32 %v44, %v50
    %v53 = vmul.f32 %v45, %v50
    %54 = vst.msk [vmem:[#allocation5] sm:$0xff] %vm31, %v52
    %55 = vst.msk [vmem:[#allocation5 + $0x8] sm:$0xff] %vm31, %v53
    // Predicated region
    $region14: #{tpu_custom_call.1} parent=1 // pred_check
      _
    $region15: #{tpu_custom_call.1} parent=1 // pred_check_branch
      %57 = sbr.rel (0) target = $region17
    $region16: #{tpu_custom_call.1} parent=1 // pred_region
      %s59 = ssub.s32 256, 256
      %60 = vsyncadd [#allocation4], %s59
      %s61 = sshll.u32 [#allocation5], 4
      %s62 = int_to_ptr.vmem [resolvable:$true] %s61
      %67 = dma.vmem_to_hbm [thread:$0]  %s62, 256, %s2, [#allocation4], 128, 128, 8
    $region17: #{tpu_custom_call.1} parent=1 // pred_fallthru
      _
    // Predicated region
    $region18: #{tpu_custom_call.1} parent=1 // pred_check
      _
    $region19: #{tpu_custom_call.1} parent=1 // pred_check_branch
      %69 = sbr.rel (0) target = $region21
    $region20: #{tpu_custom_call.1} parent=1 // pred_region
      %70 = dma.done [#allocation4], 256
    $region21: #{tpu_custom_call.1} parent=1 // pred_fallthru
      _
    %71 = vsyncpa [#allocation3], 1
    %72 = vsyncpa [#allocation4], 1

</llo_original>
